<compile_context>
chip_gen: v5e
topology: v5e:2x2
jax: 0.10.0
libtpu: 0.0.40
codegen_flags: <defaults>
</compile_context>

<pallas_src>
import functools

import jax
import jax.numpy as jnp
from jax.experimental import pallas as pl
from jax.experimental.pallas import tpu as pltpu

EPS = 1e-5
LANE = 128


def _round_up(x, m):
    return (x + m - 1) // m * m


def _bn_eval(x, gamma, beta, mean, var):
    # BatchNorm1d eval: (x - running_mean) / sqrt(running_var + eps) * gamma + beta
    return (x - mean) * jax.lax.rsqrt(var + EPS) * gamma + beta


# --------------------------------------------------------------------------- #
# Pallas kernel: in-kernel embedding gather (one-hot matmul) + fused MLP
# --------------------------------------------------------------------------- #
def tabular_kernel(cat_offsets, xcat_ref, xc_ref, tbl_ref, w1c_ref, w2_ref,
                   w3_ref, b_ref, out_ref):
    """one_hot(x_cat) @ T + x_cont @ W1c' + b1' -> ReLU -> @W2'+b2' -> ReLU -> @W3'+b3'.

    All BatchNorms and the embedding matmul are already folded into the
    weights/biases; `cat_offsets` are static Python ints (row offsets of each
    embedding table inside the concatenated folded table).
    """
    h0 = w1c_ref.shape[1]
    h1 = w2_ref.shape[1]
    out_sz = w3_ref.shape[1]
    tile_b = xcat_ref.shape[0]
    n_rows = tbl_ref.shape[0]

    # Build the (tile_b, n_rows) one-hot selector for all categorical columns.
    idx = xcat_ref[...]                                          # (tile_b, n_cat) int32
    cols = jax.lax.broadcasted_iota(jnp.int32, (tile_b, n_rows), 1)
    hit = cols == (idx[:, 0:1] + cat_offsets[0])
    for t in range(1, len(cat_offsets)):
        hit = jnp.logical_or(hit, cols == (idx[:, t:t + 1] + cat_offsets[t]))
    one_hot = hit.astype(jnp.float32)                            # (tile_b, n_rows)

    # Layer 1: embedding contribution (one-hot gather) + continuous part.
    h = (jnp.dot(one_hot, tbl_ref[...], preferred_element_type=jnp.float32)
         + jnp.dot(xc_ref[...], w1c_ref[...], preferred_element_type=jnp.float32)
         + b_ref[0:1, :h0])
    h = jnp.maximum(h, 0.0)

    # Layer 2
    h = jnp.dot(h, w2_ref[...], preferred_element_type=jnp.float32) + b_ref[1:2, :h1]
    h = jnp.maximum(h, 0.0)

    # Final Linear (un-padded out_sz; masked stores are cheap in this
    # mem-bound kernel and avoid 64x write amplification).
    out_ref[...] = (jnp.dot(h, w3_ref[...], preferred_element_type=jnp.float32)
                    + b_ref[2:3, :out_sz])


# --------------------------------------------------------------------------- #
# One-time parameter folding (eval-mode BN + embedding matmul pre-fold)
# --------------------------------------------------------------------------- #
def fold_params(params):
    f32 = jnp.float32
    h0 = params["w2"].shape[0]
    h1 = params["w2"].shape[1]
    out_sz = params["w3"].shape[1]

    # bn_cont folded into the continuous part of layer 1.
    sc = params["bnc_g"] * jax.lax.rsqrt(params["bnc_v"] + EPS)            # (1, n_cont)
    w1c = params["w1c"] * sc[0][:, None]                                   # (n_cont, h0)
    b1 = params["b1"] + (params["bnc_b"] - params["bnc_m"] * sc) @ params["w1c"]

    # Embedding tables pre-multiplied by their slice of W1 (emb part), then
    # concatenated row-wise into a single (sum ni, h0) table for the in-kernel
    # one-hot gather.  cat_offsets[t] = row offset of table t.
    folded_tables, cat_offsets = [], []
    row_off, col_off = 0, 0
    for tbl in params["emb_tables"]:
        nf = tbl.shape[1]
        folded_tables.append(tbl.astype(f32) @ params["w1e"][col_off:col_off + nf])
        cat_offsets.append(row_off)
        row_off += tbl.shape[0]
        col_off += nf
    emb_table = jnp.concatenate(folded_tables, axis=0).astype(f32)          # (n_rows, h0)

    # bn1 (post-ReLU) folded into W2's input side.
    s1 = params["bn1_g"] * jax.lax.rsqrt(params["bn1_v"] + EPS)            # (1, h0)
    w2 = params["w2"] * s1[0][:, None]
    b2 = params["b2"] + (params["bn1_b"] - params["bn1_m"] * s1) @ params["w2"]

    # bn2 (post-ReLU) folded into W3's input side.
    s2 = params["bn2_g"] * jax.lax.rsqrt(params["bn2_v"] + EPS)            # (1, h1)
    w3 = params["w3"] * s2[0][:, None]
    b3 = params["b3"] + (params["bn2_b"] - params["bn2_m"] * s2) @ params["w3"]

    # Packed biases: one (3, pack_w) VMEM-resident buffer.
    pack_w = _round_up(max(h0, h1, out_sz), LANE)
    b_packed = jnp.zeros((3, pack_w), f32)
    b_packed = b_packed.at[0, :h0].set(b1[0])
    b_packed = b_packed.at[1, :h1].set(b2[0])
    b_packed = b_packed.at[2, :out_sz].set(b3[0])

    return {
        "emb_table": emb_table,              # (sum ni, h0)
        "cat_offsets": tuple(cat_offsets),   # static python ints
        "w1c": w1c.astype(f32),              # (n_cont, h0)
        "w2": w2.astype(f32),                # (h0, h1)
        "w3": w3.astype(f32),                # (h1, out_sz) -- un-padded
        "b_packed": b_packed,                # (3, pack_w)
    }


# --------------------------------------------------------------------------- #
# Forward wrapper (factory so the table offsets are static at trace time)
# --------------------------------------------------------------------------- #
def make_tabular_forward(cat_offsets, *, max_tile=2048):
    cat_offsets = tuple(int(o) for o in cat_offsets)
    kernel = functools.partial(tabular_kernel, cat_offsets)

    @jax.jit
    def forward(x_cat, x_cont, emb_table, w1c, w2, w3, b_packed):
        B, n_cat = x_cat.shape
        n_cont = x_cont.shape[1]
        out_sz = w3.shape[1]
        x_cat = x_cat.astype(jnp.int32)
        x_cont = x_cont.astype(jnp.float32)

        # Big batch tiles amortize the ~0.35 us/step cost; aim for >=4 grid
        # steps on large batches so ("parallel",) can shard across v7x's 2 TCs.
        tile_b = max(8, min(max_tile, _round_up(pl.cdiv(B, 4), 8)))
        grid = (pl.cdiv(B, tile_b),)   # partial tail block handled by Pallas

        out = pl.pallas_call(
            kernel,
            out_shape=jax.ShapeDtypeStruct((B, out_sz), jnp.float32),
            grid=grid,
            in_specs=[
                pl.BlockSpec((tile_b, n_cat), lambda i: (i, 0)),     # x_cat (int32)
                pl.BlockSpec((tile_b, n_cont), lambda i: (i, 0)),    # x_cont
                pl.BlockSpec(emb_table.shape, lambda i: (0, 0)),     # folded emb table
                pl.BlockSpec(w1c.shape, lambda i: (0, 0)),           # W1c' (resident)
                pl.BlockSpec(w2.shape, lambda i: (0, 0)),            # W2'  (resident)
                pl.BlockSpec(w3.shape, lambda i: (0, 0)),            # W3'  (resident)
                pl.BlockSpec(b_packed.shape, lambda i: (0, 0)),      # packed biases
            ],
            out_specs=pl.BlockSpec((tile_b, out_sz), lambda i: (i, 0)),
            compiler_params=pltpu.CompilerParams(
                dimension_semantics=("parallel",),
                vmem_limit_bytes=32 * 1024 * 1024,
            ),
        )(x_cat, x_cont, emb_table, w1c, w2, w3, b_packed)
        return out

    return forward


# --------------------------------------------------------------------------- #
# Pure-JAX reference (original, unfolded math) for correctness check
# --------------------------------------------------------------------------- #
def tabular_forward_ref(x_cat, x_cont, params):
    embs = [params["emb_tables"][i][x_cat[:, i]] for i in range(len(params["emb_tables"]))]
    x_emb = jnp.concatenate(embs, axis=1).astype(jnp.float32)
    xc = _bn_eval(x_cont, params["bnc_g"], params["bnc_b"], params["bnc_m"], params["bnc_v"])
    x = jnp.concatenate([x_emb, xc], axis=1)
    w1 = jnp.concatenate([params["w1e"], params["w1c"]], axis=0)
    h = jnp.maximum(x @ w1 + params["b1"], 0.0)
    h = _bn_eval(h, params["bn1_g"], params["bn1_b"], params["bn1_m"], params["bn1_v"])
    h = jnp.maximum(h @ params["w2"] + params["b2"], 0.0)
    h = _bn_eval(h, params["bn2_g"], params["bn2_b"], params["bn2_m"], params["bn2_v"])
    return h @ params["w3"] + params["b3"]


# --------------------------------------------------------------------------- #
# Parameter init (matches the 2-hidden-layer config of the PyTorch module)
# --------------------------------------------------------------------------- #
def init_params(key, emb_szs, n_cont, out_sz, layers):
    assert len(layers) == 2, "this script instantiates the 2-hidden-layer config"
    n_emb = sum(nf for _, nf in emb_szs)
    h0, h1 = layers
    keys = iter(jax.random.split(key, 32))

    def nrm(shape, scale=0.1):
        return (scale * jax.random.normal(next(keys), shape)).astype(jnp.float32)

    def pos(shape):
        return (1.0 + 0.1 * jax.random.uniform(next(keys), shape)).astype(jnp.float32)

    params = {}
    params["emb_tables"] = [nrm((ni, nf), 1.0) for ni, nf in emb_szs]

    params["bnc_g"] = pos((1, n_cont))
    params["bnc_b"] = nrm((1, n_cont))
    params["bnc_m"] = nrm((1, n_cont))
    params["bnc_v"] = pos((1, n_cont))

    params["w1e"] = nrm((n_emb, h0))
    params["w1c"] = nrm((n_cont, h0))
    params["b1"] = nrm((1, h0))
    params["bn1_g"] = pos((1, h0))
    params["bn1_b"] = nrm((1, h0))
    params["bn1_m"] = nrm((1, h0))
    params["bn1_v"] = pos((1, h0))

    params["w2"] = nrm((h0, h1))
    params["b2"] = nrm((1, h1))
    params["bn2_g"] = pos((1, h1))
    params["bn2_b"] = nrm((1, h1))
    params["bn2_m"] = nrm((1, h1))
    params["bn2_v"] = pos((1, h1))

    params["w3"] = nrm((h1, out_sz))
    params["b3"] = nrm((1, out_sz))
    return params


if __name__ == "__main__":
    emb_szs = [(24, 12), (2, 1), (7, 4)]   # n_emb = 17
    n_cont = 6
    out_sz = 2
    layers = [32, 16]
    batch = 8

    key = jax.random.PRNGKey(0)
    k_param, k_cat0, k_cat1, k_cat2, k_cont = jax.random.split(key, 5)

    params = init_params(k_param, emb_szs, n_cont, out_sz, layers)
    folded = fold_params(params)   # one-time BN / embedding fold

    x_cat = jnp.stack(
        [
            jax.random.randint(k_cat0, (batch,), 0, emb_szs[0][0]),
            jax.random.randint(k_cat1, (batch,), 0, emb_szs[1][0]),
            jax.random.randint(k_cat2, (batch,), 0, emb_szs[2][0]),
        ],
        axis=1,
    ).astype(jnp.int32)                                   # (B, 3)
    x_cont = jax.random.normal(k_cont, (batch, n_cont), dtype=jnp.float32)

    forward = make_tabular_forward(folded["cat_offsets"])
    out = forward(x_cat, x_cont, folded["emb_table"], folded["w1c"],
                  folded["w2"], folded["w3"], folded["b_packed"])
    out = jax.block_until_ready(out)

    ref = jax.block_until_ready(tabular_forward_ref(x_cat, x_cont, params))
    assert out.shape == (batch, out_sz)
    assert jnp.allclose(out, ref, atol=1e-4, rtol=1e-4), "Pallas kernel mismatch vs reference"

    print("KERNEL_OK")
</pallas_src>

<mosaic_0001>
module attributes {stable_mosaic.version = 11 : i64} {
  func.func @tabular_kernel(%arg0: i32, %arg1: memref<8x3xi32, #tpu.memory_space<vmem>>, %arg2: memref<8x6xf32, #tpu.memory_space<vmem>>, %arg3: memref<33x32xf32, #tpu.memory_space<vmem>>, %arg4: memref<6x32xf32, #tpu.memory_space<vmem>>, %arg5: memref<32x16xf32, #tpu.memory_space<vmem>>, %arg6: memref<16x2xf32, #tpu.memory_space<vmem>>, %arg7: memref<3x128xf32, #tpu.memory_space<vmem>>, %arg8: memref<8x2xf32, #tpu.memory_space<vmem>>) attributes {dimension_semantics = [#tpu.dimension_semantics<parallel>], iteration_bounds = array<i64: 1>, scalar_prefetch = 0 : i64, scratch_operands = 0 : i64, tpu.core_type = #tpu.core_type<tc>, window_params = [{transform_indices = @transform_0, window_bounds = array<i64: 8, 3>}, {transform_indices = @transform_1, window_bounds = array<i64: 8, 6>}, {pipeline_mode = #tpu.pipeline_mode<synchronous>, transform_indices = @transform_2, window_bounds = array<i64: 33, 32>}, {pipeline_mode = #tpu.pipeline_mode<synchronous>, transform_indices = @transform_3, window_bounds = array<i64: 6, 32>}, {pipeline_mode = #tpu.pipeline_mode<synchronous>, transform_indices = @transform_4, window_bounds = array<i64: 32, 16>}, {pipeline_mode = #tpu.pipeline_mode<synchronous>, transform_indices = @transform_5, window_bounds = array<i64: 16, 2>}, {pipeline_mode = #tpu.pipeline_mode<synchronous>, transform_indices = @transform_6, window_bounds = array<i64: 3, 128>}, {transform_indices = @transform_7, window_bounds = array<i64: 8, 2>}]} {
    %c0 = arith.constant 0 : index
    %c0_0 = arith.constant 0 : index
    %0 = vector.load %arg1[%c0, %c0_0] : memref<8x3xi32, #tpu.memory_space<vmem>>, vector<8x3xi32>
    %1 = tpu.iota {dimensions = array<i32: 1>} : vector<8x33xi32>
    %2 = vector.extract_strided_slice %0 {offsets = [0, 0], sizes = [8, 1], strides = [1, 1]} : vector<8x3xi32> to vector<8x1xi32>
    %c0_i32 = arith.constant 0 : i32
    %3 = vector.broadcast %c0_i32 : i32 to vector<8x1xi32>
    %4 = arith.addi %2, %3 : vector<8x1xi32>
    %5 = vector.broadcast %4 : vector<8x1xi32> to vector<8x33xi32>
    %6 = arith.cmpi eq, %1, %5 : vector<8x33xi32>
    %7 = vector.extract_strided_slice %0 {offsets = [0, 1], sizes = [8, 1], strides = [1, 1]} : vector<8x3xi32> to vector<8x1xi32>
    %c24_i32 = arith.constant 24 : i32
    %8 = vector.broadcast %c24_i32 : i32 to vector<8x1xi32>
    %9 = arith.addi %7, %8 : vector<8x1xi32>
    %10 = vector.broadcast %9 : vector<8x1xi32> to vector<8x33xi32>
    %11 = arith.cmpi eq, %1, %10 : vector<8x33xi32>
    %12 = arith.ori %6, %11 : vector<8x33xi1>
    %13 = vector.extract_strided_slice %0 {offsets = [0, 2], sizes = [8, 1], strides = [1, 1]} : vector<8x3xi32> to vector<8x1xi32>
    %c26_i32 = arith.constant 26 : i32
    %14 = vector.broadcast %c26_i32 : i32 to vector<8x1xi32>
    %15 = arith.addi %13, %14 : vector<8x1xi32>
    %16 = vector.broadcast %15 : vector<8x1xi32> to vector<8x33xi32>
    %17 = arith.cmpi eq, %1, %16 : vector<8x33xi32>
    %18 = arith.ori %12, %17 : vector<8x33xi1>
    %19 = arith.extui %18 : vector<8x33xi1> to vector<8x33xi32>
    %20 = arith.sitofp %19 : vector<8x33xi32> to vector<8x33xf32>
    %c0_1 = arith.constant 0 : index
    %c0_2 = arith.constant 0 : index
    %21 = vector.load %arg3[%c0_1, %c0_2] : memref<33x32xf32, #tpu.memory_space<vmem>>, vector<33x32xf32>
    %cst = arith.constant dense<0.000000e+00> : vector<8x32xf32>
    %22 = tpu.matmul %20, %21, %cst {dimension_numbers = #tpu.dot_dimension_numbers<[1], [0], [0], [1], [0, 0, 1, 1], [], []>} : vector<8x33xf32>, vector<33x32xf32>, vector<8x32xf32> -> vector<8x32xf32>
    %c0_3 = arith.constant 0 : index
    %c0_4 = arith.constant 0 : index
    %23 = vector.load %arg2[%c0_3, %c0_4] : memref<8x6xf32, #tpu.memory_space<vmem>>, vector<8x6xf32>
    %c0_5 = arith.constant 0 : index
    %c0_6 = arith.constant 0 : index
    %24 = vector.load %arg4[%c0_5, %c0_6] : memref<6x32xf32, #tpu.memory_space<vmem>>, vector<6x32xf32>
    %cst_7 = arith.constant dense<0.000000e+00> : vector<8x32xf32>
    %25 = tpu.matmul %23, %24, %cst_7 {dimension_numbers = #tpu.dot_dimension_numbers<[1], [0], [0], [1], [0, 0, 1, 1], [], []>} : vector<8x6xf32>, vector<6x32xf32>, vector<8x32xf32> -> vector<8x32xf32>
    %26 = arith.addf %22, %25 : vector<8x32xf32>
    %c0_8 = arith.constant 0 : index
    %c0_9 = arith.constant 0 : index
    %27 = vector.load %arg7[%c0_8, %c0_9] : memref<3x128xf32, #tpu.memory_space<vmem>>, vector<1x32xf32>
    %28 = vector.broadcast %27 : vector<1x32xf32> to vector<8x32xf32>
    %29 = arith.addf %26, %28 : vector<8x32xf32>
    %cst_10 = arith.constant 0.000000e+00 : f32
    %30 = vector.broadcast %cst_10 : f32 to vector<8x32xf32>
    %31 = arith.maximumf %29, %30 : vector<8x32xf32>
    %c0_11 = arith.constant 0 : index
    %c0_12 = arith.constant 0 : index
    %32 = vector.load %arg5[%c0_11, %c0_12] : memref<32x16xf32, #tpu.memory_space<vmem>>, vector<32x16xf32>
    %cst_13 = arith.constant dense<0.000000e+00> : vector<8x16xf32>
    %33 = tpu.matmul %31, %32, %cst_13 {dimension_numbers = #tpu.dot_dimension_numbers<[1], [0], [0], [1], [0, 0, 1, 1], [], []>} : vector<8x32xf32>, vector<32x16xf32>, vector<8x16xf32> -> vector<8x16xf32>
    %c1 = arith.constant 1 : index
    %c0_14 = arith.constant 0 : index
    %34 = vector.load %arg7[%c1, %c0_14] : memref<3x128xf32, #tpu.memory_space<vmem>>, vector<1x16xf32>
    %35 = vector.broadcast %34 : vector<1x16xf32> to vector<8x16xf32>
    %36 = arith.addf %33, %35 : vector<8x16xf32>
    %cst_15 = arith.constant 0.000000e+00 : f32
    %37 = vector.broadcast %cst_15 : f32 to vector<8x16xf32>
    %38 = arith.maximumf %36, %37 : vector<8x16xf32>
    %c0_16 = arith.constant 0 : index
    %c0_17 = arith.constant 0 : index
    %39 = vector.load %arg6[%c0_16, %c0_17] : memref<16x2xf32, #tpu.memory_space<vmem>>, vector<16x2xf32>
    %cst_18 = arith.constant dense<0.000000e+00> : vector<8x2xf32>
    %40 = tpu.matmul %38, %39, %cst_18 {dimension_numbers = #tpu.dot_dimension_numbers<[1], [0], [0], [1], [0, 0, 1, 1], [], []>} : vector<8x16xf32>, vector<16x2xf32>, vector<8x2xf32> -> vector<8x2xf32>
    %c2 = arith.constant 2 : index
    %c0_19 = arith.constant 0 : index
    %41 = vector.load %arg7[%c2, %c0_19] : memref<3x128xf32, #tpu.memory_space<vmem>>, vector<1x2xf32>
    %42 = vector.broadcast %41 : vector<1x2xf32> to vector<8x2xf32>
    %43 = arith.addf %40, %42 : vector<8x2xf32>
    %c0_20 = arith.constant 0 : index
    %c0_21 = arith.constant 0 : index
    %44 = vector.load %arg8[%c0_20, %c0_21] : memref<8x2xf32, #tpu.memory_space<vmem>>, vector<8x2xf32>
    tpu.vector_store %arg8[%c0_20, %c0_21], %43 {strides = array<i32>} : memref<8x2xf32, #tpu.memory_space<vmem>>, vector<8x2xf32>,
    return
  }
  func.func @transform_0(%arg0: i32) -> (i32, i32) {
    %c0_i32 = arith.constant 0 : i32
    %c0_i32_0 = arith.constant 0 : i32
    return %arg0, %c0_i32 : i32, i32
  }
  func.func @transform_1(%arg0: i32) -> (i32, i32) {
    %c0_i32 = arith.constant 0 : i32
    %c0_i32_0 = arith.constant 0 : i32
    return %arg0, %c0_i32 : i32, i32
  }
  func.func @transform_2(%arg0: i32) -> (i32, i32) {
    %c0_i32 = arith.constant 0 : i32
    %c0_i32_0 = arith.constant 0 : i32
    %c0_i32_1 = arith.constant 0 : i32
    return %c0_i32, %c0_i32_0 : i32, i32
  }
  func.func @transform_3(%arg0: i32) -> (i32, i32) {
    %c0_i32 = arith.constant 0 : i32
    %c0_i32_0 = arith.constant 0 : i32
    %c0_i32_1 = arith.constant 0 : i32
    return %c0_i32, %c0_i32_0 : i32, i32
  }
  func.func @transform_4(%arg0: i32) -> (i32, i32) {
    %c0_i32 = arith.constant 0 : i32
    %c0_i32_0 = arith.constant 0 : i32
    %c0_i32_1 = arith.constant 0 : i32
    return %c0_i32, %c0_i32_0 : i32, i32
  }
  func.func @transform_5(%arg0: i32) -> (i32, i32) {
    %c0_i32 = arith.constant 0 : i32
    %c0_i32_0 = arith.constant 0 : i32
    %c0_i32_1 = arith.constant 0 : i32
    return %c0_i32, %c0_i32_0 : i32, i32
  }
  func.func @transform_6(%arg0: i32) -> (i32, i32) {
    %c0_i32 = arith.constant 0 : i32
    %c0_i32_0 = arith.constant 0 : i32
    %c0_i32_1 = arith.constant 0 : i32
    return %c0_i32, %c0_i32_0 : i32, i32
  }
  func.func @transform_7(%arg0: i32) -> (i32, i32) {
    %c0_i32 = arith.constant 0 : i32
    %c0_i32_0 = arith.constant 0 : i32
    return %arg0, %c0_i32 : i32, i32
  }
}

</mosaic_0001>

<llo_original>
// kernel: forward.1
$region0: #{forward.1}
  #allocation0 [shape = 'u32[]', space=smem, size = 0x4, offset = 0x4, fixed_abs, tag = 'smem constant byte address 0x4 - core index']
  #allocation1 [shape = 'u32[72,128]{1,0:T(1,128)}', space=vmem, size = 0x9000, scoped, tag = 'internal scratch']
  %s0 = inlined_call_operand.vmem [shape: s32[8,3], index: 0, kind: input, shape index: {}]
  %s1 = inlined_call_operand.vmem [shape: f32[8,6], index: 1, kind: input, shape index: {}]
  %s2 = inlined_call_operand.vmem [shape: f32[33,32], index: 2, kind: input, shape index: {}]
  %s3 = inlined_call_operand.vmem [shape: f32[6,32], index: 3, kind: input, shape index: {}]
  %s4 = inlined_call_operand.vmem [shape: f32[32,16], index: 4, kind: input, shape index: {}]
  %s5 = inlined_call_operand.vmem [shape: f32[16,2], index: 5, kind: input, shape index: {}]
  %s6 = inlined_call_operand.vmem [shape: f32[3,128], index: 6, kind: input, shape index: {}]
  %s7 = inlined_call_operand.vmem [shape: f32[8,2], index: 7, kind: output, shape index: {}]
  %s8 = sld [smem:[#allocation0]]
  $region38: #{forward.1} parent=0
    _
  %s10 = ssub.s32 1, %s8
  %s11 = scalar_select 0, %s10, %s8
  // Predicated region
  $region2: #{forward.1} parent=0 // pred_check
    _
  $region3: #{forward.1} parent=0 // pred_check_branch
    %13 = sbr.rel (0) target = $region5
  $region4: #{forward.1} parent=0 // pred_region
    _
  $region5: #{forward.1} parent=0 // pred_fallthru
    _
  // Predicated region
  $region6: #{forward.1} parent=0 // pred_check
    _
  $region7: #{forward.1} parent=0 // pred_check_branch
    %15 = sbr.rel (0) target = $region9
  $region8: #{forward.1} parent=0 // pred_region
    _
  $region9: #{forward.1} parent=0 // pred_fallthru
    _
  // Predicated region
  $region10: #{forward.1} parent=0 // pred_check
    _
  $region11: #{forward.1} parent=0 // pred_check_branch
    %17 = sbr.rel (0) target = $region13
  $region12: #{forward.1} parent=0 // pred_region
    _
  $region13: #{forward.1} parent=0 // pred_fallthru
    _
  // Predicated region
  $region14: #{forward.1} parent=0 // pred_check
    _
  $region15: #{forward.1} parent=0 // pred_check_branch
    %19 = sbr.rel (0) target = $region17
  $region16: #{forward.1} parent=0 // pred_region
    _
  $region17: #{forward.1} parent=0 // pred_fallthru
    _
  // Predicated region
  $region18: #{forward.1} parent=0 // pred_check
    _
  $region19: #{forward.1} parent=0 // pred_check_branch
    %21 = sbr.rel (0) target = $region21
  $region20: #{forward.1} parent=0 // pred_region
    _
  $region21: #{forward.1} parent=0 // pred_fallthru
    _
  // Predicated region
  $region22: #{forward.1} parent=0 // pred_check
    _
  $region23: #{forward.1} parent=0 // pred_check_branch
    %23 = sbr.rel (0) target = $region25
  $region24: #{forward.1} parent=0 // pred_region
    _
  $region25: #{forward.1} parent=0 // pred_fallthru
    _
  // Predicated region
  $region26: #{forward.1} parent=0 // pred_check
    _
  $region27: #{forward.1} parent=0 // pred_check_branch
    %25 = sbr.rel (0) target = $region29
  $region28: #{forward.1} parent=0 // pred_region
    _
  $region29: #{forward.1} parent=0 // pred_fallthru
    _
  %v26 = vld [vmem:[%s0] sm:$0xff]
  %v27 = vlaneseq
  %v28 = vand.u32 %v27, 127
  %29 = vset.pattern.permute.xlu0 0
  %30 = vperm.xlu0 %29, %v26
  %v31 = vpop.permute.xlu0 %30
  %vm32 = vcmp.eq.s32.totalorder %v28, %v31
  %v33 = vadd.s32 %v26, 24
  %34 = vset.pattern.permute.xlu0 1
  %35 = vperm.xlu0 %34, %v33
  %v36 = vpop.permute.xlu0 %35
  %vm37 = vcmp.eq.s32.totalorder %v28, %v36
  %vm38 = vmor %vm32, %vm37
  %v39 = vadd.s32 %v26, 26
  %40 = vset.pattern.permute.xlu0 2
  %41 = vperm.xlu0 %40, %v39
  %v42 = vpop.permute.xlu0 %41
  %vm43 = vcmp.eq.s32.totalorder %v28, %v42
  %vm44 = vmor %vm38, %vm43
  %v45 = vsel %vm44, 1, 0
  %v46 = vcvt.s32.f32 %v45
  %v47 = vld [vmem:[%s2] sm:$0xff]
  %v48 = vld [vmem:[%s2 + $0x8] sm:$0xff]
  %v49 = vld [vmem:[%s2 + $0x10] sm:$0xff]
  %v50 = vld [vmem:[%s2 + $0x18] sm:$0xff]
  %v51 = vld [vmem:[%s2 + $0x20] sm:$0x1]
  %v52 = vld [vmem:[%s1] sm:$0xff]
  %v53 = vld [vmem:[%s3] sm:$0x3f]
  %vm54 = vcmask 48128
  %v56 = vsel %vm54, %v52, 0
  %vm58 = vcmask 1045504
  %v60 = vsel %vm58, %v53, 0
  %62 = vmatpush.msra.mxu0 0.0
  %63 = vmatpush.msra.mxu0 0.0
  %64 = vmatpush.msra.mxu0 0.0
  %65 = vmatpush.msra.mxu0 0.0
  %66 = vmatpush.msra.mxu0 0.0
  %67 = vmatpush.msra.mxu0 0.0
  %68 = vmatpush.msra.mxu0 0.0
  %69 = vmatpush.msra.mxu0 0.0
  %70 = vmatpush.msra.mxu0 0.0
  %71 = vmatpush.msra.mxu0 0.0
  %72 = vmatpush.msra.mxu0 0.0
  %73 = vmatpush.msra.mxu0 0.0
  %74 = vmatpush.msra.mxu0 0.0
  %75 = vmatpush.msra.mxu0 0.0
  %76 = vmatpush.msra.mxu0 0.0
  %77 = vmatpush.msra.mxu0 %v60
  %78 = vmatmul.f32.gmra.mxu0 %v56
  %v79 = vpop.f32.mrf.mxu0
  %v80 = vadd.f32 0.0, %v79
  %81 = vdwg.mxu0
  %vm82 = vcmask 269312
  %v84 = vsel %vm82, %v46, 0
  %vm86 = vcmask 1040384
  %v88 = vsel %vm86, %v51, 0
  %90 = vmatpush.msra.mxu0 0.0
  %91 = vmatpush.msra.mxu0 0.0
  %92 = vmatpush.msra.mxu0 0.0
  %93 = vmatpush.msra.mxu0 0.0
  %94 = vmatpush.msra.mxu0 0.0
  %95 = vmatpush.msra.mxu0 0.0
  %96 = vmatpush.msra.mxu0 0.0
  %97 = vmatpush.msra.mxu0 0.0
  %98 = vmatpush.msra.mxu0 0.0
  %99 = vmatpush.msra.mxu0 0.0
  %100 = vmatpush.msra.mxu0 0.0
  %101 = vmatpush.msra.mxu0 %v88
  %102 = vmatpush.msra.mxu0 %v50
  %103 = vmatpush.msra.mxu0 %v49
  %104 = vmatpush.msra.mxu0 %v48
  %105 = vmatpush.msra.mxu0 %v47
  %106 = vmatmul.f32.gmra.mxu0 %v84
  %v107 = vpop.f32.mrf.mxu0
  %v108 = vadd.f32 %v80, %v107
  %109 = vdwg.mxu0
  %v110 = vld [vmem:[%s6] sm:$0x1]
  %v111 = vperm.slane %v110, 0
  %v112 = vadd.f32 %v108, %v111
  %v113 = vmax.f32 %v112, 0.0
  %v114 = vld [vmem:[%s4] sm:$0xff]
  %v115 = vld [vmem:[%s4 + $0x8] sm:$0xff]
  %v116 = vld [vmem:[%s4 + $0x10] sm:$0xff]
  %v117 = vld [vmem:[%s4 + $0x18] sm:$0xff]
  %v118 = vld [vmem:[%s6 + $0x1] sm:$0x1]
  %v119 = vperm.slane %v118, 0
  %vm120 = vcmask 261120
  %v122 = vsel %vm120, %v113, 0
  %124 = vmatpush.msra.mxu0 0.0
  %125 = vmatpush.msra.mxu0 0.0
  %126 = vmatpush.msra.mxu0 0.0
  %127 = vmatpush.msra.mxu0 0.0
  %128 = vmatpush.msra.mxu0 0.0
  %129 = vmatpush.msra.mxu0 0.0
  %130 = vmatpush.msra.mxu0 0.0
  %131 = vmatpush.msra.mxu0 0.0
  %132 = vmatpush.msra.mxu0 0.0
  %133 = vmatpush.msra.mxu0 0.0
  %134 = vmatpush.msra.mxu0 0.0
  %135 = vmatpush.msra.mxu0 0.0
  %136 = vmatpush.msra.mxu0 %v117
  %137 = vmatpush.msra.mxu0 %v116
  %138 = vmatpush.msra.mxu0 %v115
  %139 = vmatpush.msra.mxu0 %v114
  %140 = vmatmul.f32.gmra.mxu0 %v122
  %v141 = vpop.f32.mrf.mxu0
  %v142 = vadd.f32 %v119, %v141
  %143 = vdwg.mxu0
  %v144 = vmax.f32 %v142, 0.0
  %v145 = vld [vmem:[%s5] sm:$0xff]
  %v146 = vld [vmem:[%s5 + $0x8] sm:$0xff]
  %v147 = vld [vmem:[%s6 + $0x2] sm:$0x1]
  %v148 = vperm.slane %v147, 0
  %vm149 = vcmask 130048
  %v151 = vsel %vm149, %v144, 0
  %153 = vmatpush.msra.mxu0 0.0
  %154 = vmatpush.msra.mxu0 0.0
  %155 = vmatpush.msra.mxu0 0.0
  %156 = vmatpush.msra.mxu0 0.0
  %157 = vmatpush.msra.mxu0 0.0
  %158 = vmatpush.msra.mxu0 0.0
  %159 = vmatpush.msra.mxu0 0.0
  %160 = vmatpush.msra.mxu0 0.0
  %161 = vmatpush.msra.mxu0 0.0
  %162 = vmatpush.msra.mxu0 0.0
  %163 = vmatpush.msra.mxu0 0.0
  %164 = vmatpush.msra.mxu0 0.0
  %165 = vmatpush.msra.mxu0 0.0
  %166 = vmatpush.msra.mxu0 0.0
  %167 = vmatpush.msra.mxu0 %v146
  %168 = vmatpush.msra.mxu0 %v145
  %169 = vmatmul.f32.gmra.mxu0 %v151
  %v170 = vpop.f32.mrf.mxu0
  %v171 = vadd.f32 %v148, %v170
  %172 = vdwg.mxu0
  %vm173 = vcmask 15360
  %174 = vst.msk [vmem:[%s7] sm:$0xff] %vm173, %v171
  // Predicated region
  $region30: #{forward.1} parent=0 // pred_check
    _
  $region31: #{forward.1} parent=0 // pred_check_branch
    %176 = sbr.rel (0) target = $region33
  $region32: #{forward.1} parent=0 // pred_region
    _
  $region33: #{forward.1} parent=0 // pred_fallthru
    _
  // Predicated region
  $region34: #{forward.1} parent=0 // pred_check
    _
  $region35: #{forward.1} parent=0 // pred_check_branch
    %178 = sbr.rel (0) target = $region37
  $region36: #{forward.1} parent=0 // pred_region
    _
  $region37: #{forward.1} parent=0 // pred_fallthru
    _

</llo_original>
